<compile_context>
chip_gen: v5e
topology: v5e:2x2
jax: 0.10.0
libtpu: 0.0.40
codegen_flags: <defaults>
</compile_context>

<pallas_src>
import functools

import jax
import jax.numpy as jnp
from jax.experimental import pallas as pl
from jax.experimental.pallas import tpu as pltpu


def _round_up(x, m):
    return ((x + m - 1) // m) * m


def _dice_partial_kernel(out_ref, tgt_ref, part_ref, inter_acc, union_acc, *,
                         num_classes, lane_width, rows_per_block, num_rows,
                         steps_per_core, needs_row_mask):
    p = pl.program_id(0)   # core-split axis ("parallel")
    k = pl.program_id(1)   # reduction steps per core ("arbitrary")

    @pl.when(k == 0)
    def _init():
        inter_acc[...] = jnp.zeros_like(inter_acc)
        union_acc[...] = jnp.zeros_like(union_acc)
        part_ref[...] = jnp.zeros_like(part_ref)

    blk = p * steps_per_core + k            # un-clamped logical block index
    row_base = blk * rows_per_block

    out = out_ref[...].astype(jnp.float32)  # (TR, L) logits
    tgt = tgt_ref[...].astype(jnp.int32)    # (TR, L) expanded labels

    shape = (rows_per_block, lane_width)
    lane_iota = jax.lax.broadcasted_iota(jnp.int32, shape, 0 + 1)
    row_iota = jax.lax.broadcasted_iota(jnp.int32, shape, 0)

    # Column index of each element in the flat NCHW order (= flat_index % C).
    if lane_width % num_classes == 0:
        # flat = (row_base + r) * L + l and C | L  =>  flat % C == l % C
        col = lane_iota % num_classes
    else:
        col = (((row_base + row_iota) % num_classes)
               * (lane_width % num_classes) + lane_iota) % num_classes

    hit = col == tgt
    if needs_row_mask:
        # Zero out rows belonging to partial / redundant (clamped) blocks.
        valid = (row_base + row_iota) < num_rows
        hit = jnp.logical_and(hit, valid)
        out = jnp.where(valid, out, 0.0)

    onehot = jnp.where(hit, 1.0, 0.0)
    prod = out * onehot                     # contributes to intersection
    den = out + onehot                      # contributes to union

    # Pure-VPU partial accumulation into (8, L) accumulators; the reshape only
    # splits the sublane axis on 8-row group boundaries (layout-preserving).
    groups = rows_per_block // 8
    inter_acc[...] += jnp.sum(prod.reshape(groups, 8, lane_width), axis=0)
    union_acc[...] += jnp.sum(den.reshape(groups, 8, lane_width), axis=0)

    @pl.when(k == pl.num_programs(1) - 1)
    def _finalize():
        inter = jnp.sum(inter_acc[...])
        union = jnp.sum(union_acc[...])
        lane = jax.lax.broadcasted_iota(jnp.int32, part_ref.shape, 2)
        part_ref[...] = jnp.where(lane == 0, inter,
                                  jnp.where(lane == 1, union, 0.0))


def dice_loss_2d(output, target, smooth=1e-6, num_core_splits=2):
    """output: (N, C, H, W) logits; target: (N, H, W) int labels in [0, C)."""
    N, C, H, W = output.shape
    total = N * C * H * W

    # ---- lane-dense flat views (keep original logits dtype; no host f32 cast)
    out_flat = output.reshape(-1)                         # NCHW flat order
    tgt_dtype = jnp.int8 if C <= 127 else jnp.int32
    # target_flat[j // C] expanded to flat length (matches .view(-1,C).scatter_)
    tgt_flat = jnp.repeat(target.reshape(-1).astype(tgt_dtype), C)

    lane_width = None
    for cand in (1024, 512, 256, 128):
        if total % cand == 0:
            lane_width = cand
            break
    if lane_width is None:
        # TODO(synk): this path copies the tensors once; only hit when
        # N*C*H*W is not a multiple of 128.
        lane_width = 128
        pad = _round_up(total, lane_width) - total
        out_flat = jnp.pad(out_flat, (0, pad))
        tgt_flat = jnp.pad(tgt_flat, (0, pad), constant_values=-1)
    num_rows = out_flat.shape[0] // lane_width

    # ---- block sizing: ~4 MiB f32 per logits block, rows multiple of 32
    P = num_core_splits
    tr_cap = max(32, ((1 << 20) // lane_width) // 32 * 32)
    rows_per_core = pl.cdiv(num_rows, P)
    rows_per_block = min(tr_cap, _round_up(rows_per_core, 32))
    if num_rows < rows_per_block:
        # Tiny input: pad up to one block (cheap, input is small).
        pad_rows = rows_per_block - num_rows
        out_flat = jnp.pad(out_flat, (0, pad_rows * lane_width))
        tgt_flat = jnp.pad(tgt_flat, (0, pad_rows * lane_width),
                           constant_values=-1)
        num_rows = rows_per_block

    out2d = out_flat.reshape(num_rows, lane_width)
    tgt2d = tgt_flat.reshape(num_rows, lane_width)

    steps_per_core = pl.cdiv(pl.cdiv(num_rows, P), rows_per_block)
    num_blocks = pl.cdiv(num_rows, rows_per_block)
    needs_row_mask = (P * steps_per_core * rows_per_block) != num_rows

    def block_map(p, k):
        # Clamp so redundant trailing (p, k) steps re-read the last real block;
        # their contribution is zeroed in-kernel via the row-validity mask.
        return (jnp.minimum(p * steps_per_core + k, num_blocks - 1), 0)

    kernel = functools.partial(
        _dice_partial_kernel,
        num_classes=C, lane_width=lane_width, rows_per_block=rows_per_block,
        num_rows=num_rows, steps_per_core=steps_per_core,
        needs_row_mask=needs_row_mask)

    partials = pl.pallas_call(
        kernel,
        out_shape=jax.ShapeDtypeStruct((P, 1, 128), jnp.float32),
        grid_spec=pltpu.PrefetchScalarGridSpec(
            num_scalar_prefetch=0,
            grid=(P, steps_per_core),
            in_specs=[
                pl.BlockSpec((rows_per_block, lane_width), block_map),
                pl.BlockSpec((rows_per_block, lane_width), block_map),
            ],
            out_specs=pl.BlockSpec((1, 1, 128), lambda p, k: (p, 0, 0)),
            scratch_shapes=[
                pltpu.VMEM((8, lane_width), jnp.float32),   # intersection partials
                pltpu.VMEM((8, lane_width), jnp.float32),   # union partials
            ],
        ),
        compiler_params=pltpu.CompilerParams(
            dimension_semantics=("parallel", "arbitrary"),
            vmem_limit_bytes=32 * 1024 * 1024,
        ),
    )(out2d, tgt2d)

    inter = jnp.sum(partials[:, 0, 0])
    union = jnp.sum(partials[:, 0, 1])
    dice = (2.0 * inter + smooth) / (union + smooth)
    return (1.0 - dice).astype(jnp.float32)


def _reference(output, target, smooth=1e-6):
    """Pure-JAX transcription of the PyTorch forward, for validation."""
    N, C, H, W = output.shape
    out_flat = output.reshape(-1)
    tgt_flat = target.reshape(-1)
    onehot = jax.nn.one_hot(tgt_flat, C, dtype=jnp.float32).reshape(-1)
    inter = jnp.sum(out_flat * onehot)
    union = jnp.sum(out_flat + onehot)
    dice = (2.0 * inter + smooth) / (union + smooth)
    return 1.0 - dice


if __name__ == "__main__":
    key = jax.random.PRNGKey(0)
    k1, k2 = jax.random.split(key)

    N, C, H, W = 2, 4, 16, 16
    output = jax.random.uniform(k1, (N, C, H, W), dtype=jnp.float32)
    target = jax.random.randint(k2, (N, H, W), 0, C, dtype=jnp.int32)

    loss = jax.block_until_ready(dice_loss_2d(output, target))
    ref = jax.block_until_ready(_reference(output, target))

    assert abs(float(loss) - float(ref)) < 1e-5, (float(loss), float(ref))
    print("KERNEL_OK")
</pallas_src>

<mosaic_0001>
module attributes {stable_mosaic.version = 11 : i64} {
  func.func @_dice_partial_kernel(%arg0: i32, %arg1: i32, %arg2: memref<32x1024xf32, #tpu.memory_space<vmem>>, %arg3: memref<32x1024xi8, #tpu.memory_space<vmem>>, %arg4: memref<1x1x128xf32, #tpu.memory_space<vmem>>, %arg5: memref<8x1024xf32, #tpu.memory_space<vmem>>, %arg6: memref<8x1024xf32, #tpu.memory_space<vmem>>) attributes {dimension_semantics = [#tpu.dimension_semantics<parallel>, #tpu.dimension_semantics<arbitrary>], iteration_bounds = array<i64: 2, 1>, scalar_prefetch = 0 : i64, scratch_operands = 2 : i64, tpu.core_type = #tpu.core_type<tc>, window_params = [{transform_indices = @transform_0, window_bounds = array<i64: 32, 1024>}, {transform_indices = @transform_1, window_bounds = array<i64: 32, 1024>}, {transform_indices = @transform_2, window_bounds = array<i64: 1, 1, 128>}]} {
    %c0_i32 = arith.constant 0 : i32
    %0 = arith.cmpi eq, %arg1, %c0_i32 : i32
    %1 = arith.extui %0 : i1 to i32
    %c0_i32_0 = arith.constant 0 : i32
    %2 = arith.cmpi ne, %1, %c0_i32_0 : i32
    scf.if %2 {
      %cst_24 = arith.constant 0.000000e+00 : f32
      %53 = vector.broadcast %cst_24 : f32 to vector<8x1024xf32>
      %c0_25 = arith.constant 0 : index
      %c0_26 = arith.constant 0 : index
      %54 = vector.load %arg5[%c0_25, %c0_26] : memref<8x1024xf32, #tpu.memory_space<vmem>>, vector<8x1024xf32>
      tpu.vector_store %arg5[%c0_25, %c0_26], %53 {strides = array<i32>} : memref<8x1024xf32, #tpu.memory_space<vmem>>, vector<8x1024xf32>,
      %cst_27 = arith.constant 0.000000e+00 : f32
      %55 = vector.broadcast %cst_27 : f32 to vector<8x1024xf32>
      %c0_28 = arith.constant 0 : index
      %c0_29 = arith.constant 0 : index
      %56 = vector.load %arg6[%c0_28, %c0_29] : memref<8x1024xf32, #tpu.memory_space<vmem>>, vector<8x1024xf32>
      tpu.vector_store %arg6[%c0_28, %c0_29], %55 {strides = array<i32>} : memref<8x1024xf32, #tpu.memory_space<vmem>>, vector<8x1024xf32>,
      %cst_30 = arith.constant 0.000000e+00 : f32
      %57 = vector.broadcast %cst_30 : f32 to vector<1x1x128xf32>
      %c0_31 = arith.constant 0 : index
      %c0_32 = arith.constant 0 : index
      %c0_33 = arith.constant 0 : index
      %58 = vector.load %arg4[%c0_31, %c0_32, %c0_33] : memref<1x1x128xf32, #tpu.memory_space<vmem>>, vector<1x1x128xf32>
      tpu.vector_store %arg4[%c0_31, %c0_32, %c0_33], %57 {strides = array<i32>} : memref<1x1x128xf32, #tpu.memory_space<vmem>>, vector<1x1x128xf32>,
    } else {
    }
    %c1_i32 = arith.constant 1 : i32
    %3 = arith.muli %arg0, %c1_i32 : i32
    %4 = arith.addi %3, %arg1 : i32
    %c32_i32 = arith.constant 32 : i32
    %5 = arith.muli %4, %c32_i32 : i32
    %c0 = arith.constant 0 : index
    %c0_1 = arith.constant 0 : index
    %6 = vector.load %arg2[%c0, %c0_1] : memref<32x1024xf32, #tpu.memory_space<vmem>>, vector<32x1024xf32>
    %c0_2 = arith.constant 0 : index
    %c0_3 = arith.constant 0 : index
    %7 = vector.load %arg3[%c0_2, %c0_3] : memref<32x1024xi8, #tpu.memory_space<vmem>>, vector<32x1024xi8>
    %8 = arith.extsi %7 : vector<32x1024xi8> to vector<32x1024xi32>
    %9 = tpu.iota {dimensions = array<i32: 1>} : vector<32x1024xi32>
    %10 = tpu.iota {dimensions = array<i32: 0>} : vector<32x1024xi32>
    %c4_i32 = arith.constant 4 : i32
    %c0_i32_4 = arith.constant 0 : i32
    %11 = arith.cmpi eq, %c4_i32, %c0_i32_4 : i32
    %c1_i32_5 = arith.constant 1 : i32
    %12 = arith.select %11, %c1_i32_5, %c4_i32 : i32
    %13 = vector.broadcast %12 : i32 to vector<32x1024xi32>
    %14 = arith.remsi %9, %13 : vector<32x1024xi32>
    %c0_i32_6 = arith.constant 0 : i32
    %15 = vector.broadcast %c0_i32_6 : i32 to vector<32x1024xi32>
    %16 = arith.cmpi ne, %14, %15 : vector<32x1024xi32>
    %c0_i32_7 = arith.constant 0 : i32
    %17 = vector.broadcast %c0_i32_7 : i32 to vector<32x1024xi32>
    %18 = arith.cmpi slt, %14, %17 : vector<32x1024xi32>
    %c0_i32_8 = arith.constant 0 : i32
    %19 = arith.cmpi slt, %12, %c0_i32_8 : i32
    %20 = vector.broadcast %19 : i1 to vector<32x1024xi1>
    %21 = vector.broadcast %20 : vector<32x1024xi1> to vector<32x1024xi1>
    %22 = arith.xori %18, %21 : vector<32x1024xi1>
    %23 = arith.andi %22, %16 : vector<32x1024xi1>
    %24 = vector.broadcast %12 : i32 to vector<32x1024xi32>
    %25 = arith.addi %14, %24 : vector<32x1024xi32>
    %26 = arith.select %23, %25, %14 : vector<32x1024xi1>, vector<32x1024xi32>
    %27 = arith.cmpi eq, %26, %8 : vector<32x1024xi32>
    %28 = vector.broadcast %5 : i32 to vector<32x1024xi32>
    %29 = arith.addi %28, %10 : vector<32x1024xi32>
    %c32_i32_9 = arith.constant 32 : i32
    %30 = vector.broadcast %c32_i32_9 : i32 to vector<32x1024xi32>
    %31 = arith.cmpi slt, %29, %30 : vector<32x1024xi32>
    %32 = arith.andi %27, %31 : vector<32x1024xi1>
    %cst = arith.constant 0.000000e+00 : f32
    %33 = vector.broadcast %cst : f32 to vector<32x1024xf32>
    %34 = arith.select %31, %6, %33 : vector<32x1024xi1>, vector<32x1024xf32>
    %cst_10 = arith.constant 1.000000e+00 : f32
    %cst_11 = arith.constant 0.000000e+00 : f32
    %35 = vector.broadcast %cst_10 : f32 to vector<32x1024xf32>
    %36 = vector.broadcast %cst_11 : f32 to vector<32x1024xf32>
    %37 = arith.select %32, %35, %36 : vector<32x1024xi1>, vector<32x1024xf32>
    %38 = arith.mulf %34, %37 : vector<32x1024xf32>
    %39 = arith.addf %34, %37 : vector<32x1024xf32>
    %c0_12 = arith.constant 0 : index
    %c0_13 = arith.constant 0 : index
    %40 = vector.load %arg5[%c0_12, %c0_13] : memref<8x1024xf32, #tpu.memory_space<vmem>>, vector<8x1024xf32>
    %41 = vector.shape_cast %38 : vector<32x1024xf32> to vector<4x8x1024xf32>
    %cst_14 = arith.constant dense<0.000000e+00> : vector<8x1024xf32>
    %42 = vector.multi_reduction <add>, %41, %cst_14 [0] : vector<4x8x1024xf32> to vector<8x1024xf32>
    %43 = arith.addf %40, %42 : vector<8x1024xf32>
    %c0_15 = arith.constant 0 : index
    %c0_16 = arith.constant 0 : index
    %44 = vector.load %arg5[%c0_15, %c0_16] : memref<8x1024xf32, #tpu.memory_space<vmem>>, vector<8x1024xf32>
    tpu.vector_store %arg5[%c0_15, %c0_16], %43 {strides = array<i32>} : memref<8x1024xf32, #tpu.memory_space<vmem>>, vector<8x1024xf32>,
    %c0_17 = arith.constant 0 : index
    %c0_18 = arith.constant 0 : index
    %45 = vector.load %arg6[%c0_17, %c0_18] : memref<8x1024xf32, #tpu.memory_space<vmem>>, vector<8x1024xf32>
    %46 = vector.shape_cast %39 : vector<32x1024xf32> to vector<4x8x1024xf32>
    %cst_19 = arith.constant dense<0.000000e+00> : vector<8x1024xf32>
    %47 = vector.multi_reduction <add>, %46, %cst_19 [0] : vector<4x8x1024xf32> to vector<8x1024xf32>
    %48 = arith.addf %45, %47 : vector<8x1024xf32>
    %c0_20 = arith.constant 0 : index
    %c0_21 = arith.constant 0 : index
    %49 = vector.load %arg6[%c0_20, %c0_21] : memref<8x1024xf32, #tpu.memory_space<vmem>>, vector<8x1024xf32>
    tpu.vector_store %arg6[%c0_20, %c0_21], %48 {strides = array<i32>} : memref<8x1024xf32, #tpu.memory_space<vmem>>, vector<8x1024xf32>,
    %c0_i32_22 = arith.constant 0 : i32
    %50 = arith.cmpi eq, %arg1, %c0_i32_22 : i32
    %51 = arith.extui %50 : i1 to i32
    %c0_i32_23 = arith.constant 0 : i32
    %52 = arith.cmpi ne, %51, %c0_i32_23 : i32
    scf.if %52 {
      %c0_24 = arith.constant 0 : index
      %c0_25 = arith.constant 0 : index
      %53 = vector.load %arg5[%c0_24, %c0_25] : memref<8x1024xf32, #tpu.memory_space<vmem>>, vector<8x1024xf32>
      %54 = vector.shape_cast %53 : vector<8x1024xf32> to vector<1x8x1024xf32>
      %cst_26 = arith.constant dense<0.000000e+00> : vector<1xf32>
      %55 = vector.multi_reduction <add>, %54, %cst_26 [1, 2] : vector<1x8x1024xf32> to vector<1xf32>
      %56 = vector.shape_cast %55 : vector<1xf32> to vector<1x1x1xf32>
      %57 = vector.extract %56[0, 0, 0] : f32 from vector<1x1x1xf32>
      %c0_27 = arith.constant 0 : index
      %c0_28 = arith.constant 0 : index
      %58 = vector.load %arg6[%c0_27, %c0_28] : memref<8x1024xf32, #tpu.memory_space<vmem>>, vector<8x1024xf32>
      %59 = vector.shape_cast %58 : vector<8x1024xf32> to vector<1x8x1024xf32>
      %cst_29 = arith.constant dense<0.000000e+00> : vector<1xf32>
      %60 = vector.multi_reduction <add>, %59, %cst_29 [1, 2] : vector<1x8x1024xf32> to vector<1xf32>
      %61 = vector.shape_cast %60 : vector<1xf32> to vector<1x1x1xf32>
      %62 = vector.extract %61[0, 0, 0] : f32 from vector<1x1x1xf32>
      %63 = tpu.iota {dimensions = array<i32: 2>} : vector<1x1x128xi32>
      %c0_i32_30 = arith.constant 0 : i32
      %64 = vector.broadcast %c0_i32_30 : i32 to vector<1x1x128xi32>
      %65 = arith.cmpi eq, %63, %64 : vector<1x1x128xi32>
      %c1_i32_31 = arith.constant 1 : i32
      %66 = vector.broadcast %c1_i32_31 : i32 to vector<1x1x128xi32>
      %67 = arith.cmpi eq, %63, %66 : vector<1x1x128xi32>
      %cst_32 = arith.constant 0.000000e+00 : f32
      %68 = vector.broadcast %62 : f32 to vector<1x1x128xf32>
      %69 = vector.broadcast %cst_32 : f32 to vector<1x1x128xf32>
      %70 = arith.select %67, %68, %69 : vector<1x1x128xi1>, vector<1x1x128xf32>
      %71 = vector.broadcast %57 : f32 to vector<1x1x128xf32>
      %72 = arith.select %65, %71, %70 : vector<1x1x128xi1>, vector<1x1x128xf32>
      %c0_33 = arith.constant 0 : index
      %c0_34 = arith.constant 0 : index
      %c0_35 = arith.constant 0 : index
      %73 = vector.load %arg4[%c0_33, %c0_34, %c0_35] : memref<1x1x128xf32, #tpu.memory_space<vmem>>, vector<1x1x128xf32>
      tpu.vector_store %arg4[%c0_33, %c0_34, %c0_35], %72 {strides = array<i32>} : memref<1x1x128xf32, #tpu.memory_space<vmem>>, vector<1x1x128xf32>,
    } else {
    }
    return
  }
  func.func @transform_0(%arg0: i32, %arg1: i32) -> (i32, i32) {
    %c1_i32 = arith.constant 1 : i32
    %0 = arith.muli %arg0, %c1_i32 : i32
    %1 = arith.addi %0, %arg1 : i32
    %c0_i32 = arith.constant 0 : i32
    %2 = arith.minsi %1, %c0_i32 : i32
    %c0_i32_0 = arith.constant 0 : i32
    %c0_i32_1 = arith.constant 0 : i32
    return %2, %c0_i32_0 : i32, i32
  }
  func.func @transform_1(%arg0: i32, %arg1: i32) -> (i32, i32) {
    %c1_i32 = arith.constant 1 : i32
    %0 = arith.muli %arg0, %c1_i32 : i32
    %1 = arith.addi %0, %arg1 : i32
    %c0_i32 = arith.constant 0 : i32
    %2 = arith.minsi %1, %c0_i32 : i32
    %c0_i32_0 = arith.constant 0 : i32
    %c0_i32_1 = arith.constant 0 : i32
    return %2, %c0_i32_0 : i32, i32
  }
  func.func @transform_2(%arg0: i32, %arg1: i32) -> (i32, i32, i32) {
    %c0_i32 = arith.constant 0 : i32
    %c0_i32_0 = arith.constant 0 : i32
    %c0_i32_1 = arith.constant 0 : i32
    return %arg0, %c0_i32, %c0_i32_0 : i32, i32, i32
  }
}

</mosaic_0001>

<llo_original>
// kernel: tpu_custom_call.1
$region0: #{tpu_custom_call.1}
  #allocation0 [shape = 'u32[]', space=smem, size = 0x4, offset = 0x4, fixed_abs, tag = 'smem constant byte address 0x4 - core index']
  #allocation1 [shape = 'u32[72,128]{1,0:T(1,128)}', space=vmem, size = 0x9000, scoped, tag = 'internal scratch']
  #allocation2 [shape = 'f32[8,1024]{1,0:T(8,128)}', space=vmem, size = 0x8000, scoped, tag = 'scratch operand']
  #allocation3 [shape = 'f32[8,1024]{1,0:T(8,128)}', space=vmem, size = 0x8000, scoped, tag = 'scratch operand']
  %s0 = inlined_call_operand.hbm [shape: f32[32,1024], index: 0, kind: input, shape index: {}]
  %s1 = inlined_call_operand.hbm [shape: s8[32,1024], index: 1, kind: input, shape index: {}]
  %s2 = inlined_call_operand.hbm [shape: f32[2,1,128], index: 2, kind: output, shape index: {}]
  %s3 = sld [smem:[#allocation0]]
  $region57: #{tpu_custom_call.1} parent=0
    _
  %s5 = ssub.s32 1, %s3
  %s6 = scalar_select 0, %s5, %s3
  $region1: #{tpu_custom_call.1} parent=0
    #allocation4 [shape = 'u8[262144]{0}', space=vmem, size = 0x40000, scoped, tag = 'input window, operand 0']
    #allocation5 [shape = 's32[2]{0}', space=sflag, size = 0x8, scoped, tag = 'scoped memory for tpu_custom_call.1']
    #allocation6 [shape = 's32[2]{0}', space=sflag, size = 0x8, scoped, tag = 'scoped memory for tpu_custom_call.1']
    #allocation7 [shape = 'u8[65536]{0}', space=vmem, size = 0x10000, scoped, tag = 'input window, operand 1']
    #allocation8 [shape = 's32[2]{0}', space=sflag, size = 0x8, scoped, tag = 'scoped memory for tpu_custom_call.1']
    #allocation9 [shape = 'u8[1024]{0}', space=vmem, size = 0x400, scoped, tag = 'output window, operand 0']
    %7 = vsyncpa [#allocation5], 0
    %s8 = scalar_lea.sflag [#allocation5], 1
    %9 = vsyncpa %s8, 0
    %10 = vsyncpa [#allocation8], 0
    %s11 = scalar_lea.sflag [#allocation8], 1
    %12 = vsyncpa %s11, 0
    %13 = vsyncpa [#allocation6], 0
    %s14 = scalar_lea.sflag [#allocation6], 1
    %15 = vsyncpa %s14, 0
    loop: start=0, step=1, limit=4
    $region2: #{tpu_custom_call.1} parent=1 // loop_pre_header
      _
    $region3: #{tpu_custom_call.1} parent=1 // loop_header
      %s17 = sphi 0, %s21
      %p18 = scmp.ge.s32.totalorder %s17, 4
      %s24 = sphi 0, %s36
      %s25 = sphi 0, %s32
      %s26 = sphi 0, %s24
      %s27 = sphi 0, %s25
      %s28 = sphi 0, %s26
      %s29 = sphi 0, %s27
      %s45 = sphi 0, %s47
      %s48 = sphi 0, %s45
      %s49 = sphi 0, %s48
      %s65 = sphi 0, %s49
      %s77 = sphi 0, %s79
      %s80 = sphi 0, %s77
      %s81 = sphi 0, %s80
      %s97 = sphi 0, %s81
      %s103 = sphi 0, %s105
      %s106 = sphi 0, %s103
      %s107 = sphi 0, %s106
      %s123 = sphi 0, %s107
    $region4: #{tpu_custom_call.1} parent=1 // loop_header_branch
      %20 = sbr.rel (%p18) target = $region8
    $region5: #{tpu_custom_call.1} parent=1 // loop_body
      %s22 = ssub.s32 %s17, 1
      %s23 = ssub.s32 %s17, 2
      %s30 = sadd.s32 1, %s25
      %p31 = scmp.ge.s32.totalorder %s30, 1
      %s32 = scalar_select %p31, 0, %s30
      %s33 = sadd.s32 1, %s24
      %s34 = scalar_select %p31, %s33, %s24
      %p35 = scmp.ge.s32.totalorder %s34, 2
      %s36 = scalar_select %p35, 0, %s34
      %s37 = sadd.s32 %s24, %s25
      %p38 = scmp.lt.s32.totalorder %s37, 0
      %s39 = scalar_select %p38, %s37, 0
      %s40 = sadd.s32 %s36, %s32
      %p41 = scmp.lt.s32.totalorder %s40, 0
      %s42 = scalar_select %p41, %s40, 0
      %s43 = ssub.s32 %s39, %s42
      %p44 = scmp.eq.s32.totalorder %s43, 0
      %s46 = sadd.s32 %s45, 1
      %s47 = scalar_select %p44, %s45, %s46
      %p50 = pneg %p44
      %p51 = scmp.eq.s32.totalorder %s17, 1
      %p52 = por %p50, %p51
      %p53 = scmp.ne.s32.totalorder %s45, %s48
      %p54 = scmp.eq.s32.totalorder %s17, 0
      %p55 = por %p53, %p54
      %p56 = scmp.ne.s32.totalorder %s45, %s48
      %p57 = scmp.eq.s32.totalorder %s22, 1
      %p58 = por %p56, %p57
      %p59 = scmp.ne.s32.totalorder %s48, %s49
      %p60 = scmp.eq.s32.totalorder %s22, 0
      %p61 = por %p59, %p60
      %p62 = scmp.ne.s32.totalorder %s48, %s49
      %p63 = scmp.eq.s32.totalorder %s23, 1
      %p64 = por %p62, %p63
      %p66 = scmp.ne.s32.totalorder %s49, %s65
      %p67 = scmp.eq.s32.totalorder %s23, 0
      %p68 = por %p66, %p67
      %s69 = sadd.s32 %s24, %s25
      %p70 = scmp.lt.s32.totalorder %s69, 0
      %s71 = scalar_select %p70, %s69, 0
      %s72 = sadd.s32 %s36, %s32
      %p73 = scmp.lt.s32.totalorder %s72, 0
      %s74 = scalar_select %p73, %s72, 0
      %s75 = ssub.s32 %s71, %s74
      %p76 = scmp.eq.s32.totalorder %s75, 0
      %s78 = sadd.s32 %s77, 1
      %s79 = scalar_select %p76, %s77, %s78
      %p82 = pneg %p76
      %p83 = scmp.eq.s32.totalorder %s17, 1
      %p84 = por %p82, %p83
      %p85 = scmp.ne.s32.totalorder %s77, %s80
      %p86 = scmp.eq.s32.totalorder %s17, 0
      %p87 = por %p85, %p86
      %p88 = scmp.ne.s32.totalorder %s77, %s80
      %p89 = scmp.eq.s32.totalorder %s22, 1
      %p90 = por %p88, %p89
      %p91 = scmp.ne.s32.totalorder %s80, %s81
      %p92 = scmp.eq.s32.totalorder %s22, 0
      %p93 = por %p91, %p92
      %p94 = scmp.ne.s32.totalorder %s80, %s81
      %p95 = scmp.eq.s32.totalorder %s23, 1
      %p96 = por %p94, %p95
      %p98 = scmp.ne.s32.totalorder %s81, %s97
      %p99 = scmp.eq.s32.totalorder %s23, 0
      %p100 = por %p98, %p99
      %s101 = ssub.s32 %s24, %s36
      %p102 = scmp.eq.s32.totalorder %s101, 0
      %s104 = sadd.s32 %s103, 1
      %s105 = scalar_select %p102, %s103, %s104
      %p108 = pneg %p102
      %p109 = scmp.eq.s32.totalorder %s17, 1
      %p110 = por %p108, %p109
      %p111 = scmp.ne.s32.totalorder %s103, %s106
      %p112 = scmp.eq.s32.totalorder %s17, 0
      %p113 = por %p111, %p112
      %p114 = scmp.ne.s32.totalorder %s103, %s106
      %p115 = scmp.eq.s32.totalorder %s22, 1
      %p116 = por %p114, %p115
      %p117 = scmp.ne.s32.totalorder %s106, %s107
      %p118 = scmp.eq.s32.totalorder %s22, 0
      %p119 = por %p117, %p118
      %p120 = scmp.ne.s32.totalorder %s106, %s107
      %p121 = scmp.eq.s32.totalorder %s23, 1
      %p122 = por %p120, %p121
      %p124 = scmp.ne.s32.totalorder %s107, %s123
      %p125 = scmp.eq.s32.totalorder %s23, 0
      %p126 = por %p124, %p125
      %p127 = scmp.le.s32.totalorder 1, %s17
      %p128 = scmp.lt.s32.totalorder %s17, 3
      %p129 = pnand %p127, %p128
      %p130 = pneg %p129
      // Predicated region
      $region9: #{tpu_custom_call.1} parent=5 // pred_check
        _
      $region10: #{tpu_custom_call.1} parent=5 // pred_check_branch
        %132 = sbr.rel (%p129) target = $region12
      $region11: #{tpu_custom_call.1} parent=5 // pred_region
        %s133 = ssub.s32 %s17, 1
      $region12: #{tpu_custom_call.1} parent=5 // pred_fallthru
        _
      %p134 = scmp.lt.s32.totalorder %s17, 2
      // Predicated region
      $region13: #{tpu_custom_call.1} parent=5 // pred_check
        %p135 = pneg %p134
      $region14: #{tpu_custom_call.1} parent=5 // pred_check_branch
        %137 = sbr.rel (%p135) target = $region16
      $region15: #{tpu_custom_call.1} parent=5 // pred_region
        // Predicated region
        $region17: #{tpu_custom_call.1} parent=15 // pred_check
          %p138 = pneg %p55
        $region18: #{tpu_custom_call.1} parent=15 // pred_check_branch
          %140 = sbr.rel (%p138) target = $region20
        $region19: #{tpu_custom_call.1} parent=15 // pred_region
          %s141 = sand.u32 %s45, 1
          %s142 = scalar_lea.sflag [#allocation5], %s141
          %s143 = sand.u32 %s45, 1
          %s144 = smul.addr %s143, 256
          %s145 = scalar_lea.vmem [#allocation4], %s144
          %s146 = sadd.s32 %s24, %s25
          %p147 = scmp.lt.s32.totalorder %s146, 0
          %s148 = scalar_select %p147, %s146, 0
          %s149 = smul.u32 4, %s148
          %151 = vsyncadd %s142, 0
          %s152 = smul.addr %s149, 8
          %s153 = smul.addr %s152, 8
          %s154 = scalar_lea.hbm %s0, %s153
          %s155 = sshll.u32 %s154, 4
          %s156 = int_to_ptr.hbm [resolvable:$true] %s155
          %s157 = sshll.u32 %s145, 4
          %s158 = int_to_ptr.vmem [resolvable:$true] %s157
          %163 = dma.hbm_to_vmem [thread:$0]  %s156, 4096, %s158, %s142, 1024, 1024, 64
        $region20: #{tpu_custom_call.1} parent=15 // pred_fallthru
          _
        // Predicated region
        $region21: #{tpu_custom_call.1} parent=15 // pred_check
          %p164 = pneg %p87
        $region22: #{tpu_custom_call.1} parent=15 // pred_check_branch
          %166 = sbr.rel (%p164) target = $region24
        $region23: #{tpu_custom_call.1} parent=15 // pred_region
          %s167 = sand.u32 %s77, 1
          %s168 = scalar_lea.sflag [#allocation8], %s167
          %s169 = sand.u32 %s77, 1
          %s170 = smul.addr %s169, 64
          %s171 = scalar_lea.vmem [#allocation7], %s170
          %s172 = sadd.s32 %s24, %s25
          %p173 = scmp.lt.s32.totalorder %s172, 0
          %s174 = scalar_select %p173, %s172, 0
          %176 = vsyncadd %s168, 0
          %s177 = smul.addr %s174, 8
          %s178 = smul.addr %s177, 8
          %s179 = scalar_lea.hbm %s1, %s178
          %s181 = sshll.u32 %s179, 4
          %s182 = int_to_ptr.hbm [resolvable:$true] %s181
          %s183 = sshll.u32 %s171, 4
          %s184 = int_to_ptr.vmem [resolvable:$true] %s183
          %186 = dma.hbm_to_vmem [thread:$0]  %s182, 1024, %s184, %s168
        $region24: #{tpu_custom_call.1} parent=15 // pred_fallthru
          _
      $region16: #{tpu_custom_call.1} parent=5 // pred_fallthru
        _
      %p187 = scmp.le.s32.totalorder 1, %s17
      %p188 = scmp.lt.s32.totalorder %s17, 3
      %p189 = pnand %p187, %p188
      %p190 = pneg %p189
      // Predicated region
      $region25: #{tpu_custom_call.1} parent=5 // pred_check
        _
      $region26: #{tpu_custom_call.1} parent=5 // pred_check_branch
        %192 = sbr.rel (%p189) target = $region28
      $region27: #{tpu_custom_call.1} parent=5 // pred_region
        %s193 = ssub.s32 %s17, 1
        %s194 = sand.u32 %s48, 1
        %s195 = scalar_lea.sflag [#allocation5], %s194
        %s196 = sand.u32 %s48, 1
        %s197 = smul.addr %s196, 256
        %s198 = scalar_lea.vmem [#allocation4], %s197
        // Predicated region
        $region29: #{tpu_custom_call.1} parent=27 // pred_check
          %p199 = pneg %p61
        $region30: #{tpu_custom_call.1} parent=27 // pred_check_branch
          %201 = sbr.rel (%p199) target = $region32
        $region31: #{tpu_custom_call.1} parent=27 // pred_region
          %203 = dma.done %s195, 4096
        $region32: #{tpu_custom_call.1} parent=27 // pred_fallthru
          _
        %s204 = sand.u32 %s80, 1
        %s205 = scalar_lea.sflag [#allocation8], %s204
        %s206 = sand.u32 %s80, 1
        %s207 = smul.addr %s206, 64
        %s208 = scalar_lea.vmem [#allocation7], %s207
        // Predicated region
        $region33: #{tpu_custom_call.1} parent=27 // pred_check
          %p209 = pneg %p93
        $region34: #{tpu_custom_call.1} parent=27 // pred_check_branch
          %211 = sbr.rel (%p209) target = $region36
        $region35: #{tpu_custom_call.1} parent=27 // pred_region
          %213 = dma.done %s205, 1024
        $region36: #{tpu_custom_call.1} parent=27 // pred_fallthru
          _
        %s214 = sand.u32 %s48, 1
        %s215 = scalar_lea.sflag [#allocation5], %s214
        %s216 = sand.u32 %s48, 1
        %s217 = smul.addr %s216, 256
        %s218 = scalar_lea.vmem [#allocation4], %s217
        %p219 = pneg %p61
        %p220 = pneg %p58
        %s221 = sand.u32 %s80, 1
        %s222 = scalar_lea.sflag [#allocation8], %s221
        %s223 = sand.u32 %s80, 1
        %s224 = smul.addr %s223, 64
        %s225 = scalar_lea.vmem [#allocation7], %s224
        %p226 = pneg %p93
        %p227 = pneg %p90
        %p228 = pneg %p119
        %p229 = pneg %p116
        %s230 = sand.u32 %s106, 1
        %s231 = scalar_lea.sflag [#allocation6], %s230
        %s232 = sand.u32 %s106, 1
        %s233 = scalar_lea.vmem [#allocation9], %s232
        %s234 = sadd.s32 %s26, %s27
        %p235 = scmp.lt.s32.totalorder %s234, 0
        %s236 = scalar_select %p235, %s234, 0
        %s237 = smul.u32 4, %s236
        %s238 = sadd.s32 %s26, %s27
        %p239 = scmp.lt.s32.totalorder %s238, 0
        %s240 = scalar_select %p239, %s238, 0
        %p241 = scmp.eq.s32.totalorder %s27, 0
        // Predicated region
        $region37: #{tpu_custom_call.1} parent=27 // pred_check
          %p242 = pneg %p241
        $region38: #{tpu_custom_call.1} parent=27 // pred_check_branch
          %244 = sbr.rel (%p242) target = $region40
        $region39: #{tpu_custom_call.1} parent=27 // pred_region
          %245 = vst [vmem:[#allocation2] sm:$0xff] 0.0
          %246 = vst [vmem:[#allocation2 + $0x8] sm:$0xff] 0.0
          %247 = vst [vmem:[#allocation2 + $0x10] sm:$0xff] 0.0
          %248 = vst [vmem:[#allocation2 + $0x18] sm:$0xff] 0.0
          %249 = vst [vmem:[#allocation2 + $0x20] sm:$0xff] 0.0
          %250 = vst [vmem:[#allocation2 + $0x28] sm:$0xff] 0.0
          %251 = vst [vmem:[#allocation2 + $0x30] sm:$0xff] 0.0
          %252 = vst [vmem:[#allocation2 + $0x38] sm:$0xff] 0.0
          %253 = vst [vmem:[#allocation3] sm:$0xff] 0.0
          %254 = vst [vmem:[#allocation3 + $0x8] sm:$0xff] 0.0
          %255 = vst [vmem:[#allocation3 + $0x10] sm:$0xff] 0.0
          %256 = vst [vmem:[#allocation3 + $0x18] sm:$0xff] 0.0
          %257 = vst [vmem:[#allocation3 + $0x20] sm:$0xff] 0.0
          %258 = vst [vmem:[#allocation3 + $0x28] sm:$0xff] 0.0
          %259 = vst [vmem:[#allocation3 + $0x30] sm:$0xff] 0.0
          %260 = vst [vmem:[#allocation3 + $0x38] sm:$0xff] 0.0
          %261 = vst [vmem:[%s233] sm:$0x1] 0.0
        $region40: #{tpu_custom_call.1} parent=27 // pred_fallthru
          _
        %s262 = sadd.s32 %s26, %s27
        %s263 = smul.u32 %s262, 32
        %v264 = vld [vmem:[%s198] sm:$0xff]
        %v265 = vld [vmem:[%s198 + $0x8] sm:$0xff]
        %v266 = vld [vmem:[%s198 + $0x10] sm:$0xff]
        %v267 = vld [vmem:[%s198 + $0x18] sm:$0xff]
        %v268 = vld [vmem:[%s198 + $0x20] sm:$0xff]
        %v269 = vld [vmem:[%s198 + $0x28] sm:$0xff]
        %v270 = vld [vmem:[%s198 + $0x30] sm:$0xff]
        %v271 = vld [vmem:[%s198 + $0x38] sm:$0xff]
        %v272 = vld [vmem:[%s198 + $0x40] sm:$0xff]
        %v273 = vld [vmem:[%s198 + $0x48] sm:$0xff]
        %v274 = vld [vmem:[%s198 + $0x50] sm:$0xff]
        %v275 = vld [vmem:[%s198 + $0x58] sm:$0xff]
        %v276 = vld [vmem:[%s198 + $0x60] sm:$0xff]
        %v277 = vld [vmem:[%s198 + $0x68] sm:$0xff]
        %v278 = vld [vmem:[%s198 + $0x70] sm:$0xff]
        %v279 = vld [vmem:[%s198 + $0x78] sm:$0xff]
        %v280 = vld [vmem:[%s198 + $0x80] sm:$0xff]
        %v281 = vld [vmem:[%s198 + $0x88] sm:$0xff]
        %v282 = vld [vmem:[%s198 + $0x90] sm:$0xff]
        %v283 = vld [vmem:[%s198 + $0x98] sm:$0xff]
        %v284 = vld [vmem:[%s198 + $0xa0] sm:$0xff]
        %v285 = vld [vmem:[%s198 + $0xa8] sm:$0xff]
        %v286 = vld [vmem:[%s198 + $0xb0] sm:$0xff]
        %v287 = vld [vmem:[%s198 + $0xb8] sm:$0xff]
        %v288 = vld [vmem:[%s198 + $0xc0] sm:$0xff]
        %v289 = vld [vmem:[%s198 + $0xc8] sm:$0xff]
        %v290 = vld [vmem:[%s198 + $0xd0] sm:$0xff]
        %v291 = vld [vmem:[%s198 + $0xd8] sm:$0xff]
        %v292 = vld [vmem:[%s198 + $0xe0] sm:$0xff]
        %v293 = vld [vmem:[%s198 + $0xe8] sm:$0xff]
        %v294 = vld [vmem:[%s198 + $0xf0] sm:$0xff]
        %v295 = vld [vmem:[%s198 + $0xf8] sm:$0xff]
        %v296 = vld [vmem:[%s208] sm:$0xff]
        %v297 = vld [vmem:[%s208 + $0x8] sm:$0xff]
        %v298 = vld [vmem:[%s208 + $0x10] sm:$0xff]
        %v299 = vld [vmem:[%s208 + $0x18] sm:$0xff]
        %v300 = vld [vmem:[%s208 + $0x20] sm:$0xff]
        %v301 = vld [vmem:[%s208 + $0x28] sm:$0xff]
        %v302 = vld [vmem:[%s208 + $0x30] sm:$0xff]
        %v303 = vld [vmem:[%s208 + $0x38] sm:$0xff]
        %v304 = vunpack.c.0.s8 %v296
        %v305 = vunpack.c.0.s8 %v297
        %v306 = vunpack.c.0.s8 %v298
        %v307 = vunpack.c.0.s8 %v299
        %v308 = vunpack.c.0.s8 %v300
        %v309 = vunpack.c.0.s8 %v301
        %v310 = vunpack.c.0.s8 %v302
        %v311 = vunpack.c.0.s8 %v303
        %v312 = vunpack.c.1.s8 %v296
        %v313 = vunpack.c.1.s8 %v297
        %v314 = vunpack.c.1.s8 %v298
        %v315 = vunpack.c.1.s8 %v299
        %v316 = vunpack.c.1.s8 %v300
        %v317 = vunpack.c.1.s8 %v301
        %v318 = vunpack.c.1.s8 %v302
        %v319 = vunpack.c.1.s8 %v303
        %v320 = vunpack.c.2.s8 %v296
        %v321 = vunpack.c.2.s8 %v297
        %v322 = vunpack.c.2.s8 %v298
        %v323 = vunpack.c.2.s8 %v299
        %v324 = vunpack.c.2.s8 %v300
        %v325 = vunpack.c.2.s8 %v301
        %v326 = vunpack.c.2.s8 %v302
        %v327 = vunpack.c.2.s8 %v303
        %v328 = vunpack.c.3.s8 %v296
        %v329 = vunpack.c.3.s8 %v297
        %v330 = vunpack.c.3.s8 %v298
        %v331 = vunpack.c.3.s8 %v299
        %v332 = vunpack.c.3.s8 %v300
        %v333 = vunpack.c.3.s8 %v301
        %v334 = vunpack.c.3.s8 %v302
        %v335 = vunpack.c.3.s8 %v303
        %v336 = vlaneseq
        %v337 = vand.u32 %v336, 127
        %v338 = vadd.s32 %v337, 128
        %v339 = vadd.s32 %v337, 256
        %v340 = vadd.s32 %v337, 384
        %v341 = vadd.s32 %v337, 512
        %v342 = vadd.s32 %v337, 640
        %v343 = vadd.s32 %v337, 768
        %v344 = vadd.s32 %v337, 896
        %v345 = vlaneseq
        %v346 = vshrl.u32 %v345, 7
        %v347 = vadd.s32 %v346, 8
        %v348 = vadd.s32 %v346, 16
        %v349 = vadd.s32 %v346, 24
        %vm350 = vcmp.lt.s32.totalorder %v337, 0
        %v351 = vsub.s32 0, %v337
        %v352 = vsel %vm350, %v351, %v337
        %v353 = vshrl.u32 %v352, 2
        %v354 = vand.u32 %v352, 3
        %v355 = vsub.s32 0, %v354
        %v356 = vsel %vm350, %v355, %v354
        %vm357 = vcmp.lt.s32.totalorder %v338, 0
        %v358 = vsub.s32 0, %v338
        %v359 = vsel %vm357, %v358, %v338
        %v360 = vshrl.u32 %v359, 2
        %v361 = vand.u32 %v359, 3
        %v362 = vsub.s32 0, %v361
        %v363 = vsel %vm357, %v362, %v361
        %vm364 = vcmp.lt.s32.totalorder %v339, 0
        %v365 = vsub.s32 0, %v339
        %v366 = vsel %vm364, %v365, %v339
        %v367 = vshrl.u32 %v366, 2
        %v368 = vand.u32 %v366, 3
        %v369 = vsub.s32 0, %v368
        %v370 = vsel %vm364, %v369, %v368
        %vm371 = vcmp.lt.s32.totalorder %v340, 0
        %v372 = vsub.s32 0, %v340
        %v373 = vsel %vm371, %v372, %v340
        %v374 = vshrl.u32 %v373, 2
        %v375 = vand.u32 %v373, 3
        %v376 = vsub.s32 0, %v375
        %v377 = vsel %vm371, %v376, %v375
        %vm378 = vcmp.lt.s32.totalorder %v341, 0
        %v379 = vsub.s32 0, %v341
        %v380 = vsel %vm378, %v379, %v341
        %v381 = vshrl.u32 %v380, 2
        %v382 = vand.u32 %v380, 3
        %v383 = vsub.s32 0, %v382
        %v384 = vsel %vm378, %v383, %v382
        %vm385 = vcmp.lt.s32.totalorder %v342, 0
        %v386 = vsub.s32 0, %v342
        %v387 = vsel %vm385, %v386, %v342
        %v388 = vshrl.u32 %v387, 2
        %v389 = vand.u32 %v387, 3
        %v390 = vsub.s32 0, %v389
        %v391 = vsel %vm385, %v390, %v389
        %vm392 = vcmp.lt.s32.totalorder %v343, 0
        %v393 = vsub.s32 0, %v343
        %v394 = vsel %vm392, %v393, %v343
        %v395 = vshrl.u32 %v394, 2
        %v396 = vand.u32 %v394, 3
        %v397 = vsub.s32 0, %v396
        %v398 = vsel %vm392, %v397, %v396
        %vm399 = vcmp.lt.s32.totalorder %v344, 0
        %v400 = vsub.s32 0, %v344
        %v401 = vsel %vm399, %v400, %v344
        %v402 = vshrl.u32 %v401, 2
        %v403 = vand.u32 %v401, 3
        %v404 = vsub.s32 0, %v403
        %v405 = vsel %vm399, %v404, %v403
        %vm406 = vcmp.ne.s32.totalorder %v356, 0
        %vm407 = vcmp.ne.s32.totalorder %v363, 0
        %vm408 = vcmp.ne.s32.totalorder %v370, 0
        %vm409 = vcmp.ne.s32.totalorder %v377, 0
        %vm410 = vcmp.ne.s32.totalorder %v384, 0
        %vm411 = vcmp.ne.s32.totalorder %v391, 0
        %vm412 = vcmp.ne.s32.totalorder %v398, 0
        %vm413 = vcmp.ne.s32.totalorder %v405, 0
        %vm414 = vcmp.lt.s32.totalorder %v356, 0
        %vm415 = vcmp.lt.s32.totalorder %v363, 0
        %vm416 = vcmp.lt.s32.totalorder %v370, 0
        %vm417 = vcmp.lt.s32.totalorder %v377, 0
        %vm418 = vcmp.lt.s32.totalorder %v384, 0
        %vm419 = vcmp.lt.s32.totalorder %v391, 0
        %vm420 = vcmp.lt.s32.totalorder %v398, 0
        %vm421 = vcmp.lt.s32.totalorder %v405, 0
        %vm422 = vmand %vm414, %vm406
        %vm423 = vmand %vm415, %vm407
        %vm424 = vmand %vm416, %vm408
        %vm425 = vmand %vm417, %vm409
        %vm426 = vmand %vm418, %vm410
        %vm427 = vmand %vm419, %vm411
        %vm428 = vmand %vm420, %vm412
        %vm429 = vmand %vm421, %vm413
        %v430 = vadd.s32 %v356, 4
        %v431 = vadd.s32 %v363, 4
        %v432 = vadd.s32 %v370, 4
        %v433 = vadd.s32 %v377, 4
        %v434 = vadd.s32 %v384, 4
        %v435 = vadd.s32 %v391, 4
        %v436 = vadd.s32 %v398, 4
        %v437 = vadd.s32 %v405, 4
        %v438 = vsel %vm422, %v430, %v356
        %v439 = vsel %vm423, %v431, %v363
        %v440 = vsel %vm424, %v432, %v370
        %v441 = vsel %vm425, %v433, %v377
        %v442 = vsel %vm426, %v434, %v384
        %v443 = vsel %vm427, %v435, %v391
        %v444 = vsel %vm428, %v436, %v398
        %v445 = vsel %vm429, %v437, %v405
        %vm446 = vcmp.eq.s32.totalorder %v438, %v304
        %vm447 = vcmp.eq.s32.totalorder %v439, %v305
        %vm448 = vcmp.eq.s32.totalorder %v440, %v306
        %vm449 = vcmp.eq.s32.totalorder %v441, %v307
        %vm450 = vcmp.eq.s32.totalorder %v442, %v308
        %vm451 = vcmp.eq.s32.totalorder %v443, %v309
        %vm452 = vcmp.eq.s32.totalorder %v444, %v310
        %vm453 = vcmp.eq.s32.totalorder %v445, %v311
        %vm454 = vcmp.eq.s32.totalorder %v438, %v312
        %vm455 = vcmp.eq.s32.totalorder %v439, %v313
        %vm456 = vcmp.eq.s32.totalorder %v440, %v314
        %vm457 = vcmp.eq.s32.totalorder %v441, %v315
        %vm458 = vcmp.eq.s32.totalorder %v442, %v316
        %vm459 = vcmp.eq.s32.totalorder %v443, %v317
        %vm460 = vcmp.eq.s32.totalorder %v444, %v318
        %vm461 = vcmp.eq.s32.totalorder %v445, %v319
        %vm462 = vcmp.eq.s32.totalorder %v438, %v320
        %vm463 = vcmp.eq.s32.totalorder %v439, %v321
        %vm464 = vcmp.eq.s32.totalorder %v440, %v322
        %vm465 = vcmp.eq.s32.totalorder %v441, %v323
        %vm466 = vcmp.eq.s32.totalorder %v442, %v324
        %vm467 = vcmp.eq.s32.totalorder %v443, %v325
        %vm468 = vcmp.eq.s32.totalorder %v444, %v326
        %vm469 = vcmp.eq.s32.totalorder %v445, %v327
        %vm470 = vcmp.eq.s32.totalorder %v438, %v328
        %vm471 = vcmp.eq.s32.totalorder %v439, %v329
        %vm472 = vcmp.eq.s32.totalorder %v440, %v330
        %vm473 = vcmp.eq.s32.totalorder %v441, %v331
        %vm474 = vcmp.eq.s32.totalorder %v442, %v332
        %vm475 = vcmp.eq.s32.totalorder %v443, %v333
        %vm476 = vcmp.eq.s32.totalorder %v444, %v334
        %vm477 = vcmp.eq.s32.totalorder %v445, %v335
        %v478 = vstv %s263
        %v479 = vadd.s32 %v478, %v346
        %v480 = vadd.s32 %v478, %v347
        %v481 = vadd.s32 %v478, %v348
        %v482 = vadd.s32 %v478, %v349
        %vm483 = vcmp.lt.s32.totalorder %v479, 32
        %vm484 = vcmp.lt.s32.totalorder %v480, 32
        %vm485 = vcmp.lt.s32.totalorder %v481, 32
        %vm486 = vcmp.lt.s32.totalorder %v482, 32
        %vm487 = vmand %vm446, %vm483
        %vm488 = vmand %vm447, %vm483
        %vm489 = vmand %vm448, %vm483
        %vm490 = vmand %vm449, %vm483
        %vm491 = vmand %vm450, %vm483
        %vm492 = vmand %vm451, %vm483
        %vm493 = vmand %vm452, %vm483
        %vm494 = vmand %vm453, %vm483
        %vm495 = vmand %vm454, %vm484
        %vm496 = vmand %vm455, %vm484
        %vm497 = vmand %vm456, %vm484
        %vm498 = vmand %vm457, %vm484
        %vm499 = vmand %vm458, %vm484
        %vm500 = vmand %vm459, %vm484
        %vm501 = vmand %vm460, %vm484
        %vm502 = vmand %vm461, %vm484
        %vm503 = vmand %vm462, %vm485
        %vm504 = vmand %vm463, %vm485
        %vm505 = vmand %vm464, %vm485
        %vm506 = vmand %vm465, %vm485
        %vm507 = vmand %vm466, %vm485
        %vm508 = vmand %vm467, %vm485
        %vm509 = vmand %vm468, %vm485
        %vm510 = vmand %vm469, %vm485
        %vm511 = vmand %vm470, %vm486
        %vm512 = vmand %vm471, %vm486
        %vm513 = vmand %vm472, %vm486
        %vm514 = vmand %vm473, %vm486
        %vm515 = vmand %vm474, %vm486
        %vm516 = vmand %vm475, %vm486
        %vm517 = vmand %vm476, %vm486
        %vm518 = vmand %vm477, %vm486
        %v519 = vsel %vm483, %v264, 0.0
        %v520 = vsel %vm483, %v265, 0.0
        %v521 = vsel %vm483, %v266, 0.0
        %v522 = vsel %vm483, %v267, 0.0
        %v523 = vsel %vm483, %v268, 0.0
        %v524 = vsel %vm483, %v269, 0.0
        %v525 = vsel %vm483, %v270, 0.0
        %v526 = vsel %vm483, %v271, 0.0
        %v527 = vsel %vm484, %v272, 0.0
        %v528 = vsel %vm484, %v273, 0.0
        %v529 = vsel %vm484, %v274, 0.0
        %v530 = vsel %vm484, %v275, 0.0
        %v531 = vsel %vm484, %v276, 0.0
        %v532 = vsel %vm484, %v277, 0.0
        %v533 = vsel %vm484, %v278, 0.0
        %v534 = vsel %vm484, %v279, 0.0
        %v535 = vsel %vm485, %v280, 0.0
        %v536 = vsel %vm485, %v281, 0.0
        %v537 = vsel %vm485, %v282, 0.0
        %v538 = vsel %vm485, %v283, 0.0
        %v539 = vsel %vm485, %v284, 0.0
        %v540 = vsel %vm485, %v285, 0.0
        %v541 = vsel %vm485, %v286, 0.0
        %v542 = vsel %vm485, %v287, 0.0
        %v543 = vsel %vm486, %v288, 0.0
        %v544 = vsel %vm486, %v289, 0.0
        %v545 = vsel %vm486, %v290, 0.0
        %v546 = vsel %vm486, %v291, 0.0
        %v547 = vsel %vm486, %v292, 0.0
        %v548 = vsel %vm486, %v293, 0.0
        %v549 = vsel %vm486, %v294, 0.0
        %v550 = vsel %vm486, %v295, 0.0
        %v551 = vsel %vm487, 1.0, 0.0
        %v552 = vsel %vm488, 1.0, 0.0
        %v553 = vsel %vm489, 1.0, 0.0
        %v554 = vsel %vm490, 1.0, 0.0
        %v555 = vsel %vm491, 1.0, 0.0
        %v556 = vsel %vm492, 1.0, 0.0
        %v557 = vsel %vm493, 1.0, 0.0
        %v558 = vsel %vm494, 1.0, 0.0
        %v559 = vsel %vm495, 1.0, 0.0
        %v560 = vsel %vm496, 1.0, 0.0
        %v561 = vsel %vm497, 1.0, 0.0
        %v562 = vsel %vm498, 1.0, 0.0
        %v563 = vsel %vm499, 1.0, 0.0
        %v564 = vsel %vm500, 1.0, 0.0
        %v565 = vsel %vm501, 1.0, 0.0
        %v566 = vsel %vm502, 1.0, 0.0
        %v567 = vsel %vm503, 1.0, 0.0
        %v568 = vsel %vm504, 1.0, 0.0
        %v569 = vsel %vm505, 1.0, 0.0
        %v570 = vsel %vm506, 1.0, 0.0
        %v571 = vsel %vm507, 1.0, 0.0
        %v572 = vsel %vm508, 1.0, 0.0
        %v573 = vsel %vm509, 1.0, 0.0
        %v574 = vsel %vm510, 1.0, 0.0
        %v575 = vsel %vm511, 1.0, 0.0
        %v576 = vsel %vm512, 1.0, 0.0
        %v577 = vsel %vm513, 1.0, 0.0
        %v578 = vsel %vm514, 1.0, 0.0
        %v579 = vsel %vm515, 1.0, 0.0
        %v580 = vsel %vm516, 1.0, 0.0
        %v581 = vsel %vm517, 1.0, 0.0
        %v582 = vsel %vm518, 1.0, 0.0
        %v583 = vmul.f32 %v519, %v551
        %v584 = vmul.f32 %v520, %v552
        %v585 = vmul.f32 %v521, %v553
        %v586 = vmul.f32 %v522, %v554
        %v587 = vmul.f32 %v523, %v555
        %v588 = vmul.f32 %v524, %v556
        %v589 = vmul.f32 %v525, %v557
        %v590 = vmul.f32 %v526, %v558
        %v591 = vmul.f32 %v527, %v559
        %v592 = vmul.f32 %v528, %v560
        %v593 = vmul.f32 %v529, %v561
        %v594 = vmul.f32 %v530, %v562
        %v595 = vmul.f32 %v531, %v563
        %v596 = vmul.f32 %v532, %v564
        %v597 = vmul.f32 %v533, %v565
        %v598 = vmul.f32 %v534, %v566
        %v599 = vmul.f32 %v535, %v567
        %v600 = vmul.f32 %v536, %v568
        %v601 = vmul.f32 %v537, %v569
        %v602 = vmul.f32 %v538, %v570
        %v603 = vmul.f32 %v539, %v571
        %v604 = vmul.f32 %v540, %v572
        %v605 = vmul.f32 %v541, %v573
        %v606 = vmul.f32 %v542, %v574
        %v607 = vmul.f32 %v543, %v575
        %v608 = vmul.f32 %v544, %v576
        %v609 = vmul.f32 %v545, %v577
        %v610 = vmul.f32 %v546, %v578
        %v611 = vmul.f32 %v547, %v579
        %v612 = vmul.f32 %v548, %v580
        %v613 = vmul.f32 %v549, %v581
        %v614 = vmul.f32 %v550, %v582
        %v615 = vadd.f32 %v519, %v551
        %v616 = vadd.f32 %v520, %v552
        %v617 = vadd.f32 %v521, %v553
        %v618 = vadd.f32 %v522, %v554
        %v619 = vadd.f32 %v523, %v555
        %v620 = vadd.f32 %v524, %v556
        %v621 = vadd.f32 %v525, %v557
        %v622 = vadd.f32 %v526, %v558
        %v623 = vadd.f32 %v527, %v559
        %v624 = vadd.f32 %v528, %v560
        %v625 = vadd.f32 %v529, %v561
        %v626 = vadd.f32 %v530, %v562
        %v627 = vadd.f32 %v531, %v563
        %v628 = vadd.f32 %v532, %v564
        %v629 = vadd.f32 %v533, %v565
        %v630 = vadd.f32 %v534, %v566
        %v631 = vadd.f32 %v535, %v567
        %v632 = vadd.f32 %v536, %v568
        %v633 = vadd.f32 %v537, %v569
        %v634 = vadd.f32 %v538, %v570
        %v635 = vadd.f32 %v539, %v571
        %v636 = vadd.f32 %v540, %v572
        %v637 = vadd.f32 %v541, %v573
        %v638 = vadd.f32 %v542, %v574
        %v639 = vadd.f32 %v543, %v575
        %v640 = vadd.f32 %v544, %v576
        %v641 = vadd.f32 %v545, %v577
        %v642 = vadd.f32 %v546, %v578
        %v643 = vadd.f32 %v547, %v579
        %v644 = vadd.f32 %v548, %v580
        %v645 = vadd.f32 %v549, %v581
        %v646 = vadd.f32 %v550, %v582
        %v647 = vld [vmem:[#allocation2] sm:$0xff]
        %v648 = vld [vmem:[#allocation2 + $0x8] sm:$0xff]
        %v649 = vld [vmem:[#allocation2 + $0x10] sm:$0xff]
        %v650 = vld [vmem:[#allocation2 + $0x18] sm:$0xff]
        %v651 = vld [vmem:[#allocation2 + $0x20] sm:$0xff]
        %v652 = vld [vmem:[#allocation2 + $0x28] sm:$0xff]
        %v653 = vld [vmem:[#allocation2 + $0x30] sm:$0xff]
        %v654 = vld [vmem:[#allocation2 + $0x38] sm:$0xff]
        %v655 = vadd.f32 %v583, %v591
        %v656 = vadd.f32 %v655, %v599
        %v657 = vadd.f32 %v656, %v607
        %v658 = vadd.f32 %v584, %v592
        %v659 = vadd.f32 %v658, %v600
        %v660 = vadd.f32 %v659, %v608
        %v661 = vadd.f32 %v585, %v593
        %v662 = vadd.f32 %v661, %v601
        %v663 = vadd.f32 %v662, %v609
        %v664 = vadd.f32 %v586, %v594
        %v665 = vadd.f32 %v664, %v602
        %v666 = vadd.f32 %v665, %v610
        %v667 = vadd.f32 %v587, %v595
        %v668 = vadd.f32 %v667, %v603
        %v669 = vadd.f32 %v668, %v611
        %v670 = vadd.f32 %v588, %v596
        %v671 = vadd.f32 %v670, %v604
        %v672 = vadd.f32 %v671, %v612
        %v673 = vadd.f32 %v589, %v597
        %v674 = vadd.f32 %v673, %v605
        %v675 = vadd.f32 %v674, %v613
        %v676 = vadd.f32 %v590, %v598
        %v677 = vadd.f32 %v676, %v606
        %v678 = vadd.f32 %v677, %v614
        %v679 = vadd.f32 %v647, %v657
        %v680 = vadd.f32 %v648, %v660
        %v681 = vadd.f32 %v649, %v663
        %v682 = vadd.f32 %v650, %v666
        %v683 = vadd.f32 %v651, %v669
        %v684 = vadd.f32 %v652, %v672
        %v685 = vadd.f32 %v653, %v675
        %v686 = vadd.f32 %v654, %v678
        %687 = vst [vmem:[#allocation2] sm:$0xff] %v679
        %688 = vst [vmem:[#allocation2 + $0x8] sm:$0xff] %v680
        %689 = vst [vmem:[#allocation2 + $0x10] sm:$0xff] %v681
        %690 = vst [vmem:[#allocation2 + $0x18] sm:$0xff] %v682
        %691 = vst [vmem:[#allocation2 + $0x20] sm:$0xff] %v683
        %692 = vst [vmem:[#allocation2 + $0x28] sm:$0xff] %v684
        %693 = vst [vmem:[#allocation2 + $0x30] sm:$0xff] %v685
        %694 = vst [vmem:[#allocation2 + $0x38] sm:$0xff] %v686
        %v695 = vld [vmem:[#allocation3] sm:$0xff]
        %v696 = vld [vmem:[#allocation3 + $0x8] sm:$0xff]
        %v697 = vld [vmem:[#allocation3 + $0x10] sm:$0xff]
        %v698 = vld [vmem:[#allocation3 + $0x18] sm:$0xff]
        %v699 = vld [vmem:[#allocation3 + $0x20] sm:$0xff]
        %v700 = vld [vmem:[#allocation3 + $0x28] sm:$0xff]
        %v701 = vld [vmem:[#allocation3 + $0x30] sm:$0xff]
        %v702 = vld [vmem:[#allocation3 + $0x38] sm:$0xff]
        %v703 = vadd.f32 %v615, %v623
        %v704 = vadd.f32 %v703, %v631
        %v705 = vadd.f32 %v704, %v639
        %v706 = vadd.f32 %v616, %v624
        %v707 = vadd.f32 %v706, %v632
        %v708 = vadd.f32 %v707, %v640
        %v709 = vadd.f32 %v617, %v625
        %v710 = vadd.f32 %v709, %v633
        %v711 = vadd.f32 %v710, %v641
        %v712 = vadd.f32 %v618, %v626
        %v713 = vadd.f32 %v712, %v634
        %v714 = vadd.f32 %v713, %v642
        %v715 = vadd.f32 %v619, %v627
        %v716 = vadd.f32 %v715, %v635
        %v717 = vadd.f32 %v716, %v643
        %v718 = vadd.f32 %v620, %v628
        %v719 = vadd.f32 %v718, %v636
        %v720 = vadd.f32 %v719, %v644
        %v721 = vadd.f32 %v621, %v629
        %v722 = vadd.f32 %v721, %v637
        %v723 = vadd.f32 %v722, %v645
        %v724 = vadd.f32 %v622, %v630
        %v725 = vadd.f32 %v724, %v638
        %v726 = vadd.f32 %v725, %v646
        %v727 = vadd.f32 %v695, %v705
        %v728 = vadd.f32 %v696, %v708
        %v729 = vadd.f32 %v697, %v711
        %v730 = vadd.f32 %v698, %v714
        %v731 = vadd.f32 %v699, %v717
        %v732 = vadd.f32 %v700, %v720
        %v733 = vadd.f32 %v701, %v723
        %v734 = vadd.f32 %v702, %v726
        %735 = vst [vmem:[#allocation3] sm:$0xff] %v727
        %736 = vst [vmem:[#allocation3 + $0x8] sm:$0xff] %v728
        %737 = vst [vmem:[#allocation3 + $0x10] sm:$0xff] %v729
        %738 = vst [vmem:[#allocation3 + $0x18] sm:$0xff] %v730
        %739 = vst [vmem:[#allocation3 + $0x20] sm:$0xff] %v731
        %740 = vst [vmem:[#allocation3 + $0x28] sm:$0xff] %v732
        %741 = vst [vmem:[#allocation3 + $0x30] sm:$0xff] %v733
        %742 = vst [vmem:[#allocation3 + $0x38] sm:$0xff] %v734
        // Predicated region
        $region41: #{tpu_custom_call.1} parent=27 // pred_check
          %p743 = pneg %p241
        $region42: #{tpu_custom_call.1} parent=27 // pred_check_branch
          %745 = sbr.rel (%p743) target = $region44
        $region43: #{tpu_custom_call.1} parent=27 // pred_region
          %v746 = vld [vmem:[#allocation2] sm:$0xff]
          %v747 = vld [vmem:[#allocation2 + $0x8] sm:$0xff]
          %v748 = vld [vmem:[#allocation2 + $0x10] sm:$0xff]
          %v749 = vld [vmem:[#allocation2 + $0x18] sm:$0xff]
          %v750 = vld [vmem:[#allocation2 + $0x20] sm:$0xff]
          %v751 = vld [vmem:[#allocation2 + $0x28] sm:$0xff]
          %v752 = vld [vmem:[#allocation2 + $0x30] sm:$0xff]
          %v753 = vld [vmem:[#allocation2 + $0x38] sm:$0xff]
          %v754 = vadd.f32 %v746, %v747
          %v755 = vadd.f32 %v754, %v748
          %v756 = vadd.f32 %v755, %v749
          %v757 = vadd.f32 %v756, %v750
          %v758 = vadd.f32 %v757, %v751
          %v759 = vadd.f32 %v758, %v752
          %v760 = vadd.f32 %v759, %v753
          %761 = vadd.xlane.f32.xlu0 %v760
          %v762 = vpop.xlane.xlu0 %761
          %v763 = vrot.slane %v762, 4
          %v764 = vadd.f32 %v762, %v763
          %v765 = vrot.slane %v764, 2
          %v766 = vadd.f32 %v764, %v765
          %v767 = vrot.slane %v766, 1
          %v768 = vadd.f32 %v766, %v767
          %s769 = vtos %v768
          %v770 = vld [vmem:[#allocation3] sm:$0xff]
          %v771 = vld [vmem:[#allocation3 + $0x8] sm:$0xff]
          %v772 = vld [vmem:[#allocation3 + $0x10] sm:$0xff]
          %v773 = vld [vmem:[#allocation3 + $0x18] sm:$0xff]
          %v774 = vld [vmem:[#allocation3 + $0x20] sm:$0xff]
          %v775 = vld [vmem:[#allocation3 + $0x28] sm:$0xff]
          %v776 = vld [vmem:[#allocation3 + $0x30] sm:$0xff]
          %v777 = vld [vmem:[#allocation3 + $0x38] sm:$0xff]
          %v778 = vadd.f32 %v770, %v771
          %v779 = vadd.f32 %v778, %v772
          %v780 = vadd.f32 %v779, %v773
          %v781 = vadd.f32 %v780, %v774
          %v782 = vadd.f32 %v781, %v775
          %v783 = vadd.f32 %v782, %v776
          %v784 = vadd.f32 %v783, %v777
          %785 = vadd.xlane.f32.xlu0 %v784
          %v786 = vpop.xlane.xlu0 %785
          %v787 = vrot.slane %v786, 4
          %v788 = vadd.f32 %v786, %v787
          %v789 = vrot.slane %v788, 2
          %v790 = vadd.f32 %v788, %v789
          %v791 = vrot.slane %v790, 1
          %v792 = vadd.f32 %v790, %v791
          %s793 = vtos %v792
          %vm794 = vcmp.eq.s32.totalorder %v337, 0
          %vm795 = vcmp.eq.s32.totalorder %v337, 1
          %v796 = vstv %s793
          %v797 = vsel %vm795, %v796, 0.0
          %v798 = vstv %s769
          %v799 = vsel %vm794, %v798, %v797
          %800 = vst [vmem:[%s233] sm:$0x1] %v799
        $region44: #{tpu_custom_call.1} parent=27 // pred_fallthru
          _
        %s801 = sand.u32 %s106, 1
        %s802 = scalar_lea.sflag [#allocation6], %s801
        %s803 = sand.u32 %s106, 1
        %s804 = scalar_lea.vmem [#allocation9], %s803
        // Predicated region
        $region45: #{tpu_custom_call.1} parent=27 // pred_check
          %p805 = pneg %p116
        $region46: #{tpu_custom_call.1} parent=27 // pred_check_branch
          %807 = sbr.rel (%p805) target = $region48
        $region47: #{tpu_custom_call.1} parent=27 // pred_region
          %809 = vsyncadd %s802, 0
          %s810 = scalar_lea.hbm %s2, %s26
          %s812 = sshll.u32 %s804, 4
          %s813 = int_to_ptr.vmem [resolvable:$true] %s812
          %s814 = sshll.u32 %s810, 4
          %s815 = int_to_ptr.hbm [resolvable:$true] %s814
          %817 = dma.vmem_to_hbm [thread:$0]  %s813, 16, %s815, %s802
        $region48: #{tpu_custom_call.1} parent=27 // pred_fallthru
          _
      $region28: #{tpu_custom_call.1} parent=5 // pred_fallthru
        _
      %p818 = scmp.le.s32.totalorder 2, %s17
      // Predicated region
      $region49: #{tpu_custom_call.1} parent=5 // pred_check
        %p819 = pneg %p818
      $region50: #{tpu_custom_call.1} parent=5 // pred_check_branch
        %821 = sbr.rel (%p819) target = $region52
      $region51: #{tpu_custom_call.1} parent=5 // pred_region
        %s822 = ssub.s32 %s17, 2
        // Predicated region
        $region53: #{tpu_custom_call.1} parent=51 // pred_check
          %p823 = pneg %p122
        $region54: #{tpu_custom_call.1} parent=51 // pred_check_branch
          %825 = sbr.rel (%p823) target = $region56
        $region55: #{tpu_custom_call.1} parent=51 // pred_region
          %s826 = sand.u32 %s107, 1
          %s827 = scalar_lea.sflag [#allocation6], %s826
          %s828 = sand.u32 %s107, 1
          %s829 = scalar_lea.vmem [#allocation9], %s828
          %831 = dma.done %s827, 16
        $region56: #{tpu_custom_call.1} parent=51 // pred_fallthru
          _
      $region52: #{tpu_custom_call.1} parent=5 // pred_fallthru
        _
    $region6: #{tpu_custom_call.1} parent=1 // loop_footer
      %s21 = sadd.s32 1, %s17
    $region7: #{tpu_custom_call.1} parent=1 // loop_footer_branch
      %16 = sbr.rel target = $region3
    $region8: #{tpu_custom_call.1} parent=1 // loop_exit
      _
    %832 = vsyncpa [#allocation5], 1
    %s833 = scalar_lea.sflag [#allocation5], 1
    %834 = vsyncpa %s833, 1
    %835 = vsyncpa [#allocation8], 1
    %s836 = scalar_lea.sflag [#allocation8], 1
    %837 = vsyncpa %s836, 1
    %838 = vsyncpa [#allocation6], 1
    %s839 = scalar_lea.sflag [#allocation6], 1
    %840 = vsyncpa %s839, 1

</llo_original>
